<compile_context>
chip_gen: v7x
topology: tpu7x:2x2x1
jax: 0.10.0
libtpu: 0.0.40
codegen_flags: <defaults>
</compile_context>

<pallas_src>
import functools

import jax
import jax.numpy as jnp
import numpy as np
from jax.experimental import pallas as pl
from jax.experimental.pallas import tpu as pltpu


def _round_up(v, m):
    return (v + m - 1) // m * m


def _fused_kernel(xcol_ref, w_ref, gb_ref, out_ref, acc_ref, *,
                  n_batch, hw, eps):
    """xcol_ref: (M, KP) bf16 im2col slab, w_ref: (KP, CoutP) bf16,
       gb_ref: (2, CoutP) f32 [gamma; beta], out_ref: (N, CoutP) f32,
       acc_ref: (M, CoutP) f32 VMEM scratch."""
    m = n_batch * hw
    coutp = w_ref.shape[-1]

    # Convolution: a single MXU matmul over the whole contraction (K = KH*KW*Cin,
    # zero-padded), f32 accumulation, result parked in VMEM scratch.
    acc_ref[...] = jnp.dot(xcol_ref[...], w_ref[...],
                           preferred_element_type=jnp.float32)

    # BatchNorm2d training-mode batch statistics over all M = N*OH*OW positions,
    # one streaming pass (sum + sum-of-squares), biased variance like PyTorch.
    inv_m = 1.0 / m
    a = acc_ref[...]
    s1 = jnp.sum(a, axis=0, keepdims=True)               # (1, CoutP)
    s2 = jnp.sum(a * a, axis=0, keepdims=True)           # (1, CoutP)
    mean = s1 * inv_m
    var = jnp.maximum(s2 * inv_m - mean * mean, 0.0)     # clamp cancellation
    gamma = gb_ref[0:1, :]
    beta = gb_ref[1:2, :]
    scale = gamma * jax.lax.rsqrt(var + eps)              # rsqrt -> EUP slot
    shift = beta - mean * scale

    # Folded BN affine + ReLU + global average pool: one more streaming pass,
    # then a single lane-dense store.
    y = jnp.maximum(acc_ref[...] * scale + shift, 0.0)    # (M, CoutP)
    pooled = y.reshape(n_batch, hw, coutp).sum(axis=1) * (1.0 / hw)
    out_ref[...] = pooled                                 # (N, CoutP)


def conv_bn_relu_gapool(x, weight, bias, gamma, beta, *, stride, padding,
                        eps=1e-5):
    """Forward of Conv_bn_dynamic_apool. x: (N, Cin, H, W) -> (N, Cout, 1, 1).

    `bias` is accepted for API parity but intentionally unused: BatchNorm's
    mean subtraction cancels any per-channel constant added by the conv, so
    dropping it is exact (not an approximation).
    """
    del bias
    n, cin, h, w = x.shape
    cout, _, kh, kw = weight.shape
    oh = (h + 2 * padding - kh) // stride + 1
    ow = (w + 2 * padding - kw) // stride + 1
    m = n * oh * ow
    k = kh * kw * cin
    kp = _round_up(k, 128)
    coutp = _round_up(cout, 128)

    # im2col slab on the wrapper side (XLA fuses pad + transpose + gather).
    # Tap ordering along the lane axis is (kh, kw, cin), matching w2 below.
    xp = jnp.pad(x, ((0, 0), (0, 0), (padding, padding), (padding, padding)))
    xp = xp.transpose(0, 2, 3, 1)                          # (N, Hp, Wp, Cin)
    taps = [xp[:, i:i + stride * oh:stride, j:j + stride * ow:stride, :]
            for i in range(kh) for j in range(kw)]
    xcol = jnp.concatenate(taps, axis=-1).reshape(m, k)    # (M, KH*KW*Cin)
    xcol = jnp.pad(xcol, ((0, 0), (0, kp - k))).astype(jnp.bfloat16)

    # OIHW -> (KH*KW*Cin, Cout), zero-padded on both contraction and lane axes.
    w2 = weight.transpose(2, 3, 1, 0).reshape(k, cout)
    w2 = jnp.pad(w2, ((0, kp - k), (0, coutp - cout))).astype(jnp.bfloat16)

    # gamma/beta combined into one block; zero-padding keeps padded channels 0.
    gb = jnp.stack([gamma, beta], axis=0).astype(jnp.float32)   # (2, Cout)
    gb = jnp.pad(gb, ((0, 0), (0, coutp - cout)))

    kernel = functools.partial(_fused_kernel, n_batch=n, hw=oh * ow, eps=eps)

    cost = pl.CostEstimate(
        flops=2 * m * kp * coutp,
        transcendentals=coutp,
        bytes_accessed=(xcol.size * 2 + w2.size * 2 + gb.size * 4
                        + n * coutp * 4))

    out = pl.pallas_call(
        kernel,
        out_shape=jax.ShapeDtypeStruct((n, coutp), jnp.float32),
        grid=(1,),
        in_specs=[
            pl.BlockSpec((m, kp), lambda i: (0, 0)),
            pl.BlockSpec((kp, coutp), lambda i: (0, 0)),
            pl.BlockSpec((2, coutp), lambda i: (0, 0)),
        ],
        out_specs=pl.BlockSpec((n, coutp), lambda i: (0, 0)),
        scratch_shapes=[pltpu.VMEM((m, coutp), jnp.float32)],
        compiler_params=pltpu.CompilerParams(
            dimension_semantics=("arbitrary",)),
        cost_estimate=cost,
    )(xcol, w2, gb)

    return out[:, :cout].reshape(n, cout, 1, 1)


def _reference(x, weight, bias, gamma, beta, *, stride, padding, eps=1e-5):
    conv = jax.lax.conv_general_dilated(
        x, weight, window_strides=(stride, stride),
        padding=[(padding, padding), (padding, padding)],
        dimension_numbers=("NCHW", "OIHW", "NCHW"))
    conv = conv + bias.reshape(1, -1, 1, 1)
    mean = conv.mean(axis=(0, 2, 3), keepdims=True)
    var = ((conv - mean) ** 2).mean(axis=(0, 2, 3), keepdims=True)
    y = (conv - mean) / jnp.sqrt(var + eps)
    y = y * gamma.reshape(1, -1, 1, 1) + beta.reshape(1, -1, 1, 1)
    y = jnp.maximum(y, 0.0)
    return y.mean(axis=(2, 3), keepdims=True)


if __name__ == "__main__":
    # Module config: Conv_bn_dynamic_apool(in_channels=4, out_channels=8,
    #                                      kernel_size=3, stride=1, padding=1)
    in_channels, out_channels, kernel_size, stride, padding = 4, 8, 3, 1, 1
    n, h, w = 2, 16, 16
    eps = 1e-5

    key = jax.random.PRNGKey(0)
    kx, kw_, kb = jax.random.split(key, 3)

    x = jax.random.normal(kx, (n, in_channels, h, w), dtype=jnp.float32)
    fan_in = in_channels * kernel_size * kernel_size
    bound = 1.0 / np.sqrt(fan_in)
    weight = jax.random.uniform(
        kw_, (out_channels, in_channels, kernel_size, kernel_size),
        minval=-bound, maxval=bound, dtype=jnp.float32)
    bias = jax.random.uniform(kb, (out_channels,), minval=-bound, maxval=bound,
                              dtype=jnp.float32)
    gamma = jnp.ones((out_channels,), dtype=jnp.float32)   # BN affine init
    beta = jnp.zeros((out_channels,), dtype=jnp.float32)

    out = conv_bn_relu_gapool(x, weight, bias, gamma, beta,
                              stride=stride, padding=padding, eps=eps)
    out = jax.block_until_ready(out)

    ref = _reference(x, weight, bias, gamma, beta,
                     stride=stride, padding=padding, eps=eps)
    ref = jax.block_until_ready(ref)

    assert out.shape == (n, out_channels, 1, 1), out.shape
    # Tolerance reflects bf16 MXU operands (f32 accumulation); BN re-normalizes,
    # so the pooled outputs agree to ~1e-3 absolute against the f32 reference.
    np.testing.assert_allclose(np.asarray(out), np.asarray(ref),
                               rtol=1e-2, atol=2e-3)
    print("KERNEL_OK")
</pallas_src>

<mosaic_0001>
module attributes {stable_mosaic.version = 11 : i64} {
  func.func @_fused_kernel(%arg0: i32, %arg1: memref<512x128xbf16, #tpu.memory_space<vmem>>, %arg2: memref<128x128xbf16, #tpu.memory_space<vmem>>, %arg3: memref<2x128xf32, #tpu.memory_space<vmem>>, %arg4: memref<2x128xf32, #tpu.memory_space<vmem>>, %arg5: memref<512x128xf32, #tpu.memory_space<vmem>>) attributes {dimension_semantics = [#tpu.dimension_semantics<arbitrary>], iteration_bounds = array<i64: 1>, scalar_prefetch = 0 : i64, scratch_operands = 1 : i64, tpu.core_type = #tpu.core_type<tc>, window_params = [{pipeline_mode = #tpu.pipeline_mode<synchronous>, transform_indices = @transform_0, window_bounds = array<i64: 512, 128>}, {pipeline_mode = #tpu.pipeline_mode<synchronous>, transform_indices = @transform_1, window_bounds = array<i64: 128, 128>}, {pipeline_mode = #tpu.pipeline_mode<synchronous>, transform_indices = @transform_2, window_bounds = array<i64: 2, 128>}, {pipeline_mode = #tpu.pipeline_mode<synchronous>, transform_indices = @transform_3, window_bounds = array<i64: 2, 128>}]} {
    %c0 = arith.constant 0 : index
    %c0_0 = arith.constant 0 : index
    %0 = vector.load %arg1[%c0, %c0_0] : memref<512x128xbf16, #tpu.memory_space<vmem>>, vector<512x128xbf16>
    %c0_1 = arith.constant 0 : index
    %c0_2 = arith.constant 0 : index
    %1 = vector.load %arg2[%c0_1, %c0_2] : memref<128x128xbf16, #tpu.memory_space<vmem>>, vector<128x128xbf16>
    %cst = arith.constant dense<0.000000e+00> : vector<512x128xf32>
    %2 = tpu.matmul %0, %1, %cst {dimension_numbers = #tpu.dot_dimension_numbers<[1], [0], [0], [1], [0, 0, 1, 1], [], []>} : vector<512x128xbf16>, vector<128x128xbf16>, vector<512x128xf32> -> vector<512x128xf32>
    %c0_3 = arith.constant 0 : index
    %c0_4 = arith.constant 0 : index
    %3 = vector.load %arg5[%c0_3, %c0_4] : memref<512x128xf32, #tpu.memory_space<vmem>>, vector<512x128xf32>
    tpu.vector_store %arg5[%c0_3, %c0_4], %2 {strides = array<i32>} : memref<512x128xf32, #tpu.memory_space<vmem>>, vector<512x128xf32>,
    %c0_5 = arith.constant 0 : index
    %c0_6 = arith.constant 0 : index
    %4 = vector.load %arg5[%c0_5, %c0_6] : memref<512x128xf32, #tpu.memory_space<vmem>>, vector<512x128xf32>
    %cst_7 = arith.constant dense<0.000000e+00> : vector<128xf32>
    %5 = vector.multi_reduction <add>, %4, %cst_7 [0] : vector<512x128xf32> to vector<128xf32>
    %6 = vector.shape_cast %5 : vector<128xf32> to vector<1x128xf32>
    %7 = arith.mulf %4, %4 : vector<512x128xf32>
    %cst_8 = arith.constant dense<0.000000e+00> : vector<128xf32>
    %8 = vector.multi_reduction <add>, %7, %cst_8 [0] : vector<512x128xf32> to vector<128xf32>
    %9 = vector.shape_cast %8 : vector<128xf32> to vector<1x128xf32>
    %cst_9 = arith.constant 0.001953125 : f32
    %10 = vector.broadcast %cst_9 : f32 to vector<1x128xf32>
    %11 = arith.mulf %6, %10 : vector<1x128xf32>
    %cst_10 = arith.constant 0.001953125 : f32
    %12 = vector.broadcast %cst_10 : f32 to vector<1x128xf32>
    %13 = arith.mulf %9, %12 : vector<1x128xf32>
    %14 = arith.mulf %11, %11 : vector<1x128xf32>
    %15 = arith.subf %13, %14 : vector<1x128xf32>
    %cst_11 = arith.constant 0.000000e+00 : f32
    %16 = vector.broadcast %cst_11 : f32 to vector<1x128xf32>
    %17 = arith.maximumf %15, %16 : vector<1x128xf32>
    %c0_12 = arith.constant 0 : index
    %c0_13 = arith.constant 0 : index
    %18 = vector.load %arg3[%c0_12, %c0_13] : memref<2x128xf32, #tpu.memory_space<vmem>>, vector<1x128xf32>
    %c1 = arith.constant 1 : index
    %c0_14 = arith.constant 0 : index
    %19 = vector.load %arg3[%c1, %c0_14] : memref<2x128xf32, #tpu.memory_space<vmem>>, vector<1x128xf32>
    %cst_15 = arith.constant 9.99999974E-6 : f32
    %20 = vector.broadcast %cst_15 : f32 to vector<1x128xf32>
    %21 = arith.addf %17, %20 : vector<1x128xf32>
    %22 = math.rsqrt %21 : vector<1x128xf32>
    %23 = arith.mulf %18, %22 : vector<1x128xf32>
    %24 = arith.mulf %11, %23 : vector<1x128xf32>
    %25 = arith.subf %19, %24 : vector<1x128xf32>
    %c0_16 = arith.constant 0 : index
    %c0_17 = arith.constant 0 : index
    %26 = vector.load %arg5[%c0_16, %c0_17] : memref<512x128xf32, #tpu.memory_space<vmem>>, vector<512x128xf32>
    %27 = vector.broadcast %23 : vector<1x128xf32> to vector<512x128xf32>
    %28 = arith.mulf %26, %27 : vector<512x128xf32>
    %29 = vector.broadcast %25 : vector<1x128xf32> to vector<512x128xf32>
    %30 = arith.addf %28, %29 : vector<512x128xf32>
    %cst_18 = arith.constant 0.000000e+00 : f32
    %31 = vector.broadcast %cst_18 : f32 to vector<512x128xf32>
    %32 = arith.maximumf %30, %31 : vector<512x128xf32>
    %33 = vector.shape_cast %32 : vector<512x128xf32> to vector<2x256x128xf32>
    %cst_19 = arith.constant dense<0.000000e+00> : vector<2x128xf32>
    %34 = vector.multi_reduction <add>, %33, %cst_19 [1] : vector<2x256x128xf32> to vector<2x128xf32>
    %cst_20 = arith.constant 3.906250e-03 : f32
    %35 = vector.broadcast %cst_20 : f32 to vector<2x128xf32>
    %36 = arith.mulf %34, %35 : vector<2x128xf32>
    %c0_21 = arith.constant 0 : index
    %c0_22 = arith.constant 0 : index
    %37 = vector.load %arg4[%c0_21, %c0_22] : memref<2x128xf32, #tpu.memory_space<vmem>>, vector<2x128xf32>
    tpu.vector_store %arg4[%c0_21, %c0_22], %36 {strides = array<i32>} : memref<2x128xf32, #tpu.memory_space<vmem>>, vector<2x128xf32>,
    return
  }
  func.func @transform_0(%arg0: i32) -> (i32, i32) {
    %c0_i32 = arith.constant 0 : i32
    %c0_i32_0 = arith.constant 0 : i32
    %c0_i32_1 = arith.constant 0 : i32
    return %c0_i32, %c0_i32_0 : i32, i32
  }
  func.func @transform_1(%arg0: i32) -> (i32, i32) {
    %c0_i32 = arith.constant 0 : i32
    %c0_i32_0 = arith.constant 0 : i32
    %c0_i32_1 = arith.constant 0 : i32
    return %c0_i32, %c0_i32_0 : i32, i32
  }
  func.func @transform_2(%arg0: i32) -> (i32, i32) {
    %c0_i32 = arith.constant 0 : i32
    %c0_i32_0 = arith.constant 0 : i32
    %c0_i32_1 = arith.constant 0 : i32
    return %c0_i32, %c0_i32_0 : i32, i32
  }
  func.func @transform_3(%arg0: i32) -> (i32, i32) {
    %c0_i32 = arith.constant 0 : i32
    %c0_i32_0 = arith.constant 0 : i32
    %c0_i32_1 = arith.constant 0 : i32
    return %c0_i32, %c0_i32_0 : i32, i32
  }
}

</mosaic_0001>

<llo_original>
// kernel: tpu_custom_call.1
$region0: #{tpu_custom_call.1}
  #allocation0 [shape = 'u32[]', space=smem, size = 0x4, offset = 0x4, fixed_abs, tag = 'smem constant byte address 0x4 - core index']
  #allocation1 [shape = 'u32[144,128]{1,0:T(1,128)}', space=vmem, size = 0x12000, scoped, tag = 'internal scratch']
  #allocation2 [shape = 'f32[512,128]{1,0:T(8,128)}', space=vmem, size = 0x40000, scoped, tag = 'scratch operand']
  %s0 = inlined_call_operand.hbm [shape: bf16[512,128], index: 0, kind: input, shape index: {}]
  %s1 = inlined_call_operand.hbm [shape: bf16[128,128], index: 1, kind: input, shape index: {}]
  %s2 = inlined_call_operand.vmem [shape: f32[2,128], index: 2, kind: input, shape index: {}]
  %s3 = inlined_call_operand.hbm [shape: f32[2,128], index: 3, kind: output, shape index: {}]
  %s4 = sld [smem:[#allocation0]]
  $region30: #{tpu_custom_call.1} parent=0
    _
  %s6 = ssub.s32 1, %s4
  %s7 = scalar_select 0, %s6, %s4
  $region1: #{tpu_custom_call.1} parent=0
    #allocation3 [shape = 'u8[131072]{0}', space=vmem, size = 0x20000, scoped, tag = 'input window, operand 0, single buffered']
    #allocation4 [shape = 's32[1]{0}', space=sflag, size = 0x4, scoped, tag = 'scoped memory for tpu_custom_call.1']
    #allocation5 [shape = 's32[1]{0}', space=sflag, size = 0x4, scoped, tag = 'scoped memory for tpu_custom_call.1']
    #allocation6 [shape = 'u8[32768]{0}', space=vmem, size = 0x8000, scoped, tag = 'input window, operand 1, single buffered']
    #allocation7 [shape = 's32[1]{0}', space=sflag, size = 0x4, scoped, tag = 'scoped memory for tpu_custom_call.1']
    #allocation8 [shape = 'u8[1024]{0}', space=vmem, size = 0x400, scoped, tag = 'output window, operand 0, single buffered']
    %8 = vsyncpa [#allocation4], 0
    %9 = vsyncpa [#allocation7], 0
    %10 = vsyncpa [#allocation5], 0
    // Predicated region
    $region2: #{tpu_custom_call.1} parent=1 // pred_check
      _
    $region3: #{tpu_custom_call.1} parent=1 // pred_check_branch
      %12 = sbr.rel (0) target = $region5
    $region4: #{tpu_custom_call.1} parent=1 // pred_region
      %s14 = ssub.s32 4096, 4096
      %15 = vsyncadd [#allocation4], %s14
      %s16 = sshll.u32 [#allocation3], 4
      %s17 = int_to_ptr.vmem [resolvable:$true] %s16
      %22 = dma.hbm_to_vmem [thread:$0]  %s0, 4096, %s17, [#allocation4], 64, 64, 4
    $region5: #{tpu_custom_call.1} parent=1 // pred_fallthru
      _
    // Predicated region
    $region6: #{tpu_custom_call.1} parent=1 // pred_check
      _
    $region7: #{tpu_custom_call.1} parent=1 // pred_check_branch
      %24 = sbr.rel (0) target = $region9
    $region8: #{tpu_custom_call.1} parent=1 // pred_region
      %s26 = ssub.s32 1024, 1024
      %27 = vsyncadd [#allocation7], %s26
      %s28 = sshll.u32 [#allocation6], 4
      %s29 = int_to_ptr.vmem [resolvable:$true] %s28
      %34 = dma.hbm_to_vmem [thread:$0]  %s1, 1024, %s29, [#allocation7], 64, 64, 4
    $region9: #{tpu_custom_call.1} parent=1 // pred_fallthru
      _
    // Predicated region
    $region10: #{tpu_custom_call.1} parent=1 // pred_check
      _
    $region11: #{tpu_custom_call.1} parent=1 // pred_check_branch
      %36 = sbr.rel (0) target = $region13
    $region12: #{tpu_custom_call.1} parent=1 // pred_region
      _
    $region13: #{tpu_custom_call.1} parent=1 // pred_fallthru
      _
    // Predicated region
    $region14: #{tpu_custom_call.1} parent=1 // pred_check
      _
    $region15: #{tpu_custom_call.1} parent=1 // pred_check_branch
      %38 = sbr.rel (0) target = $region17
    $region16: #{tpu_custom_call.1} parent=1 // pred_region
      %39 = dma.done [#allocation4], 4096
    $region17: #{tpu_custom_call.1} parent=1 // pred_fallthru
      _
    // Predicated region
    $region18: #{tpu_custom_call.1} parent=1 // pred_check
      _
    $region19: #{tpu_custom_call.1} parent=1 // pred_check_branch
      %41 = sbr.rel (0) target = $region21
    $region20: #{tpu_custom_call.1} parent=1 // pred_region
      %42 = dma.done [#allocation7], 1024
    $region21: #{tpu_custom_call.1} parent=1 // pred_fallthru
      _
    %v44 = vld [vmem:[#allocation3] sm:$0xf]
    %v45 = vld [vmem:[#allocation3 + $0x4] sm:$0xf]
    %v46 = vld [vmem:[#allocation3 + $0x8] sm:$0xf]
    %v47 = vld [vmem:[#allocation3 + $0xc] sm:$0xf]
    %v48 = vld [vmem:[#allocation3 + $0x10] sm:$0xf]
    %v49 = vld [vmem:[#allocation3 + $0x14] sm:$0xf]
    %v50 = vld [vmem:[#allocation3 + $0x18] sm:$0xf]
    %v51 = vld [vmem:[#allocation3 + $0x1c] sm:$0xf]
    %v52 = vld [vmem:[#allocation3 + $0x20] sm:$0xf]
    %v53 = vld [vmem:[#allocation3 + $0x24] sm:$0xf]
    %v54 = vld [vmem:[#allocation3 + $0x28] sm:$0xf]
    %v55 = vld [vmem:[#allocation3 + $0x2c] sm:$0xf]
    %v56 = vld [vmem:[#allocation3 + $0x30] sm:$0xf]
    %v57 = vld [vmem:[#allocation3 + $0x34] sm:$0xf]
    %v58 = vld [vmem:[#allocation3 + $0x38] sm:$0xf]
    %v59 = vld [vmem:[#allocation3 + $0x3c] sm:$0xf]
    %v60 = vld [vmem:[#allocation3 + $0x40] sm:$0xf]
    %v61 = vld [vmem:[#allocation3 + $0x44] sm:$0xf]
    %v62 = vld [vmem:[#allocation3 + $0x48] sm:$0xf]
    %v63 = vld [vmem:[#allocation3 + $0x4c] sm:$0xf]
    %v64 = vld [vmem:[#allocation3 + $0x50] sm:$0xf]
    %v65 = vld [vmem:[#allocation3 + $0x54] sm:$0xf]
    %v66 = vld [vmem:[#allocation3 + $0x58] sm:$0xf]
    %v67 = vld [vmem:[#allocation3 + $0x5c] sm:$0xf]
    %v68 = vld [vmem:[#allocation3 + $0x60] sm:$0xf]
    %v69 = vld [vmem:[#allocation3 + $0x64] sm:$0xf]
    %v70 = vld [vmem:[#allocation3 + $0x68] sm:$0xf]
    %v71 = vld [vmem:[#allocation3 + $0x6c] sm:$0xf]
    %v72 = vld [vmem:[#allocation3 + $0x70] sm:$0xf]
    %v73 = vld [vmem:[#allocation3 + $0x74] sm:$0xf]
    %v74 = vld [vmem:[#allocation3 + $0x78] sm:$0xf]
    %v75 = vld [vmem:[#allocation3 + $0x7c] sm:$0xf]
    %v76 = vld [vmem:[#allocation3 + $0x80] sm:$0xf]
    %v77 = vld [vmem:[#allocation3 + $0x84] sm:$0xf]
    %v78 = vld [vmem:[#allocation3 + $0x88] sm:$0xf]
    %v79 = vld [vmem:[#allocation3 + $0x8c] sm:$0xf]
    %v80 = vld [vmem:[#allocation3 + $0x90] sm:$0xf]
    %v81 = vld [vmem:[#allocation3 + $0x94] sm:$0xf]
    %v82 = vld [vmem:[#allocation3 + $0x98] sm:$0xf]
    %v83 = vld [vmem:[#allocation3 + $0x9c] sm:$0xf]
    %v84 = vld [vmem:[#allocation3 + $0xa0] sm:$0xf]
    %v85 = vld [vmem:[#allocation3 + $0xa4] sm:$0xf]
    %v86 = vld [vmem:[#allocation3 + $0xa8] sm:$0xf]
    %v87 = vld [vmem:[#allocation3 + $0xac] sm:$0xf]
    %v88 = vld [vmem:[#allocation3 + $0xb0] sm:$0xf]
    %v89 = vld [vmem:[#allocation3 + $0xb4] sm:$0xf]
    %v90 = vld [vmem:[#allocation3 + $0xb8] sm:$0xf]
    %v91 = vld [vmem:[#allocation3 + $0xbc] sm:$0xf]
    %v92 = vld [vmem:[#allocation3 + $0xc0] sm:$0xf]
    %v93 = vld [vmem:[#allocation3 + $0xc4] sm:$0xf]
    %v94 = vld [vmem:[#allocation3 + $0xc8] sm:$0xf]
    %v95 = vld [vmem:[#allocation3 + $0xcc] sm:$0xf]
    %v96 = vld [vmem:[#allocation3 + $0xd0] sm:$0xf]
    %v97 = vld [vmem:[#allocation3 + $0xd4] sm:$0xf]
    %v98 = vld [vmem:[#allocation3 + $0xd8] sm:$0xf]
    %v99 = vld [vmem:[#allocation3 + $0xdc] sm:$0xf]
    %v100 = vld [vmem:[#allocation3 + $0xe0] sm:$0xf]
    %v101 = vld [vmem:[#allocation3 + $0xe4] sm:$0xf]
    %v102 = vld [vmem:[#allocation3 + $0xe8] sm:$0xf]
    %v103 = vld [vmem:[#allocation3 + $0xec] sm:$0xf]
    %v104 = vld [vmem:[#allocation3 + $0xf0] sm:$0xf]
    %v105 = vld [vmem:[#allocation3 + $0xf4] sm:$0xf]
    %v106 = vld [vmem:[#allocation3 + $0xf8] sm:$0xf]
    %v107 = vld [vmem:[#allocation3 + $0xfc] sm:$0xf]
    %v108 = vld [vmem:[#allocation6] sm:$0xf]
    %v109 = vld [vmem:[#allocation6 + $0x4] sm:$0xf]
    %v110 = vld [vmem:[#allocation6 + $0x8] sm:$0xf]
    %v111 = vld [vmem:[#allocation6 + $0xc] sm:$0xf]
    %v112 = vld [vmem:[#allocation6 + $0x10] sm:$0xf]
    %v113 = vld [vmem:[#allocation6 + $0x14] sm:$0xf]
    %v114 = vld [vmem:[#allocation6 + $0x18] sm:$0xf]
    %v115 = vld [vmem:[#allocation6 + $0x1c] sm:$0xf]
    %v116 = vld [vmem:[#allocation6 + $0x20] sm:$0xf]
    %v117 = vld [vmem:[#allocation6 + $0x24] sm:$0xf]
    %v118 = vld [vmem:[#allocation6 + $0x28] sm:$0xf]
    %v119 = vld [vmem:[#allocation6 + $0x2c] sm:$0xf]
    %v120 = vld [vmem:[#allocation6 + $0x30] sm:$0xf]
    %v121 = vld [vmem:[#allocation6 + $0x34] sm:$0xf]
    %v122 = vld [vmem:[#allocation6 + $0x38] sm:$0xf]
    %v123 = vld [vmem:[#allocation6 + $0x3c] sm:$0xf]
    %v188 = vunpack.c.l.b16 %v44
    %v189 = vunpack.c.l.b16 %v45
    %v190 = vunpack.c.l.b16 %v46
    %v191 = vunpack.c.l.b16 %v47
    %v192 = vunpack.c.l.b16 %v48
    %v193 = vunpack.c.l.b16 %v49
    %v194 = vunpack.c.l.b16 %v50
    %v195 = vunpack.c.l.b16 %v51
    %v196 = vunpack.c.l.b16 %v52
    %v197 = vunpack.c.l.b16 %v53
    %v198 = vunpack.c.l.b16 %v54
    %v199 = vunpack.c.l.b16 %v55
    %v200 = vunpack.c.l.b16 %v56
    %v201 = vunpack.c.l.b16 %v57
    %v202 = vunpack.c.l.b16 %v58
    %v203 = vunpack.c.l.b16 %v59
    %v204 = vunpack.c.l.b16 %v60
    %v205 = vunpack.c.l.b16 %v61
    %v206 = vunpack.c.l.b16 %v62
    %v207 = vunpack.c.l.b16 %v63
    %v208 = vunpack.c.l.b16 %v64
    %v209 = vunpack.c.l.b16 %v65
    %v210 = vunpack.c.l.b16 %v66
    %v211 = vunpack.c.l.b16 %v67
    %v212 = vunpack.c.l.b16 %v68
    %v213 = vunpack.c.l.b16 %v69
    %v214 = vunpack.c.l.b16 %v70
    %v215 = vunpack.c.l.b16 %v71
    %v216 = vunpack.c.l.b16 %v72
    %v217 = vunpack.c.l.b16 %v73
    %v218 = vunpack.c.l.b16 %v74
    %v219 = vunpack.c.l.b16 %v75
    %v220 = vunpack.c.l.b16 %v76
    %v221 = vunpack.c.l.b16 %v77
    %v222 = vunpack.c.l.b16 %v78
    %v223 = vunpack.c.l.b16 %v79
    %v224 = vunpack.c.l.b16 %v80
    %v225 = vunpack.c.l.b16 %v81
    %v226 = vunpack.c.l.b16 %v82
    %v227 = vunpack.c.l.b16 %v83
    %v228 = vunpack.c.l.b16 %v84
    %v229 = vunpack.c.l.b16 %v85
    %v230 = vunpack.c.l.b16 %v86
    %v231 = vunpack.c.l.b16 %v87
    %v232 = vunpack.c.l.b16 %v88
    %v233 = vunpack.c.l.b16 %v89
    %v234 = vunpack.c.l.b16 %v90
    %v235 = vunpack.c.l.b16 %v91
    %v236 = vunpack.c.l.b16 %v92
    %v237 = vunpack.c.l.b16 %v93
    %v238 = vunpack.c.l.b16 %v94
    %v239 = vunpack.c.l.b16 %v95
    %v240 = vunpack.c.l.b16 %v96
    %v241 = vunpack.c.l.b16 %v97
    %v242 = vunpack.c.l.b16 %v98
    %v243 = vunpack.c.l.b16 %v99
    %v244 = vunpack.c.l.b16 %v100
    %v245 = vunpack.c.l.b16 %v101
    %v246 = vunpack.c.l.b16 %v102
    %v247 = vunpack.c.l.b16 %v103
    %v248 = vunpack.c.l.b16 %v104
    %v249 = vunpack.c.l.b16 %v105
    %v250 = vunpack.c.l.b16 %v106
    %v251 = vunpack.c.l.b16 %v107
    %v252 = vpack.c.b16 %v189, %v188
    %v253 = vpack.c.b16 %v191, %v190
    %v254 = vpack.c.b16 %v193, %v192
    %v255 = vpack.c.b16 %v195, %v194
    %v256 = vpack.c.b16 %v197, %v196
    %v257 = vpack.c.b16 %v199, %v198
    %v258 = vpack.c.b16 %v201, %v200
    %v259 = vpack.c.b16 %v203, %v202
    %v260 = vpack.c.b16 %v205, %v204
    %v261 = vpack.c.b16 %v207, %v206
    %v262 = vpack.c.b16 %v209, %v208
    %v263 = vpack.c.b16 %v211, %v210
    %v264 = vpack.c.b16 %v213, %v212
    %v265 = vpack.c.b16 %v215, %v214
    %v266 = vpack.c.b16 %v217, %v216
    %v267 = vpack.c.b16 %v219, %v218
    %v268 = vpack.c.b16 %v221, %v220
    %v269 = vpack.c.b16 %v223, %v222
    %v270 = vpack.c.b16 %v225, %v224
    %v271 = vpack.c.b16 %v227, %v226
    %v272 = vpack.c.b16 %v229, %v228
    %v273 = vpack.c.b16 %v231, %v230
    %v274 = vpack.c.b16 %v233, %v232
    %v275 = vpack.c.b16 %v235, %v234
    %v276 = vpack.c.b16 %v237, %v236
    %v277 = vpack.c.b16 %v239, %v238
    %v278 = vpack.c.b16 %v241, %v240
    %v279 = vpack.c.b16 %v243, %v242
    %v280 = vpack.c.b16 %v245, %v244
    %v281 = vpack.c.b16 %v247, %v246
    %v282 = vpack.c.b16 %v249, %v248
    %v283 = vpack.c.b16 %v251, %v250
    %v332 = vunpack.c.l.b16 %v108
    %v333 = vunpack.c.l.b16 %v109
    %v334 = vunpack.c.l.b16 %v110
    %v335 = vunpack.c.l.b16 %v111
    %v336 = vunpack.c.l.b16 %v112
    %v337 = vunpack.c.l.b16 %v113
    %v338 = vunpack.c.l.b16 %v114
    %v339 = vunpack.c.l.b16 %v115
    %v340 = vunpack.c.l.b16 %v116
    %v341 = vunpack.c.l.b16 %v117
    %v342 = vunpack.c.l.b16 %v118
    %v343 = vunpack.c.l.b16 %v119
    %v344 = vunpack.c.l.b16 %v120
    %v345 = vunpack.c.l.b16 %v121
    %v346 = vunpack.c.l.b16 %v122
    %v347 = vunpack.c.l.b16 %v123
    %v348 = vpack.c.b16 %v333, %v332
    %v349 = vpack.c.b16 %v335, %v334
    %v350 = vpack.c.b16 %v337, %v336
    %v351 = vpack.c.b16 %v339, %v338
    %v352 = vpack.c.b16 %v341, %v340
    %v353 = vpack.c.b16 %v343, %v342
    %v354 = vpack.c.b16 %v345, %v344
    %v355 = vpack.c.b16 %v347, %v346
    %364 = vmatprep.subr.bf16.mxu0 0
    %365 = vmatpush1.bf16.msra.mxu0 %v348
    %366 = vmatprep.subr.bf16.mxu0 0
    %367 = vmatpush1.bf16.msra.mxu0 %v349
    %368 = vmatprep.subr.bf16.mxu0 0
    %369 = vmatpush1.bf16.msra.mxu0 %v350
    %370 = vmatprep.subr.bf16.mxu0 0
    %371 = vmatpush1.bf16.msra.mxu0 %v351
    %372 = vmatprep.subr.bf16.mxu0 0
    %373 = vmatpush1.bf16.msra.mxu0 %v352
    %374 = vmatprep.subr.bf16.mxu0 0
    %375 = vmatpush1.bf16.msra.mxu0 %v353
    %376 = vmatprep.subr.bf16.mxu0 0
    %377 = vmatpush1.bf16.msra.mxu0 %v354
    %378 = vmatprep.subr.bf16.mxu0 0
    %379 = vmatpush1.bf16.msra.mxu0 %v355
    %380 = vmatprep.subr.bf16.mxu0 0
    %381 = vmatpush1.bf16.msra.mxu0 0
    %382 = vmatprep.subr.bf16.mxu0 0
    %383 = vmatpush1.bf16.msra.mxu0 0
    %384 = vmatprep.subr.bf16.mxu0 0
    %385 = vmatpush1.bf16.msra.mxu0 0
    %386 = vmatprep.subr.bf16.mxu0 0
    %387 = vmatpush1.bf16.msra.mxu0 0
    %388 = vmatprep.subr.bf16.mxu0 0
    %389 = vmatpush1.bf16.msra.mxu0 0
    %390 = vmatprep.subr.bf16.mxu0 0
    %391 = vmatpush1.bf16.msra.mxu0 0
    %392 = vmatprep.subr.bf16.mxu0 0
    %393 = vmatpush1.bf16.msra.mxu0 0
    %394 = vmatprep.subr.bf16.mxu0 0
    %395 = vmatpush1.bf16.msra.mxu0 0
    %396 = vmatprep.mubr.bf16.mxu0 0
    %397 = vmatmul.mubr.bf16.gmra.mrb[0].mxu0 %v252
    %v398 = vpop.f32.mrb[0].mxu0
    %v399 = vadd.f32 0.0, %v398
    %v400 = vpop.f32.mrb[0].mxu0
    %v401 = vpop.f32.mrb[0].mxu0
    %v402 = vadd.f32 0.0, %v401
    %v403 = vpop.f32.mrb[0].mxu0
    %404 = vmatprep.mubr.bf16.mxu0 0
    %405 = vmatmul.mubr.bf16.gmra.mrb[0].mxu0 %v253
    %v406 = vpop.f32.mrb[0].mxu0
    %v407 = vadd.f32 0.0, %v406
    %v408 = vpop.f32.mrb[0].mxu0
    %v409 = vpop.f32.mrb[0].mxu0
    %v410 = vadd.f32 0.0, %v409
    %v411 = vpop.f32.mrb[0].mxu0
    %412 = vmatprep.mubr.bf16.mxu0 0
    %413 = vmatmul.mubr.bf16.gmra.mrb[0].mxu0 %v254
    %v414 = vpop.f32.mrb[0].mxu0
    %v415 = vadd.f32 0.0, %v414
    %v416 = vpop.f32.mrb[0].mxu0
    %v417 = vpop.f32.mrb[0].mxu0
    %v418 = vadd.f32 0.0, %v417
    %v419 = vpop.f32.mrb[0].mxu0
    %420 = vmatprep.mubr.bf16.mxu0 0
    %421 = vmatmul.mubr.bf16.gmra.mrb[0].mxu0 %v255
    %v422 = vpop.f32.mrb[0].mxu0
    %v423 = vadd.f32 0.0, %v422
    %v424 = vpop.f32.mrb[0].mxu0
    %v425 = vpop.f32.mrb[0].mxu0
    %v426 = vadd.f32 0.0, %v425
    %v427 = vpop.f32.mrb[0].mxu0
    %428 = vmatprep.mubr.bf16.mxu0 0
    %429 = vmatmul.mubr.bf16.gmra.mrb[0].mxu0 %v256
    %v430 = vpop.f32.mrb[0].mxu0
    %v431 = vadd.f32 0.0, %v430
    %v432 = vpop.f32.mrb[0].mxu0
    %v433 = vpop.f32.mrb[0].mxu0
    %v434 = vadd.f32 0.0, %v433
    %v435 = vpop.f32.mrb[0].mxu0
    %436 = vmatprep.mubr.bf16.mxu0 0
    %437 = vmatmul.mubr.bf16.gmra.mrb[0].mxu0 %v257
    %v438 = vpop.f32.mrb[0].mxu0
    %v439 = vadd.f32 0.0, %v438
    %v440 = vpop.f32.mrb[0].mxu0
    %v441 = vpop.f32.mrb[0].mxu0
    %v442 = vadd.f32 0.0, %v441
    %v443 = vpop.f32.mrb[0].mxu0
    %444 = vmatprep.mubr.bf16.mxu0 0
    %445 = vmatmul.mubr.bf16.gmra.mrb[0].mxu0 %v258
    %v446 = vpop.f32.mrb[0].mxu0
    %v447 = vadd.f32 0.0, %v446
    %v448 = vpop.f32.mrb[0].mxu0
    %v449 = vpop.f32.mrb[0].mxu0
    %v450 = vadd.f32 0.0, %v449
    %v451 = vpop.f32.mrb[0].mxu0
    %452 = vmatprep.mubr.bf16.mxu0 0
    %453 = vmatmul.mubr.bf16.gmra.mrb[0].mxu0 %v259
    %v454 = vpop.f32.mrb[0].mxu0
    %v455 = vadd.f32 0.0, %v454
    %v456 = vpop.f32.mrb[0].mxu0
    %v457 = vpop.f32.mrb[0].mxu0
    %v458 = vadd.f32 0.0, %v457
    %v459 = vpop.f32.mrb[0].mxu0
    %460 = vmatprep.mubr.bf16.mxu0 0
    %461 = vmatmul.mubr.bf16.gmra.mrb[0].mxu0 %v260
    %v462 = vpop.f32.mrb[0].mxu0
    %v463 = vadd.f32 0.0, %v462
    %v464 = vpop.f32.mrb[0].mxu0
    %v465 = vpop.f32.mrb[0].mxu0
    %v466 = vadd.f32 0.0, %v465
    %v467 = vpop.f32.mrb[0].mxu0
    %468 = vmatprep.mubr.bf16.mxu0 0
    %469 = vmatmul.mubr.bf16.gmra.mrb[0].mxu0 %v261
    %v470 = vpop.f32.mrb[0].mxu0
    %v471 = vadd.f32 0.0, %v470
    %v472 = vpop.f32.mrb[0].mxu0
    %v473 = vpop.f32.mrb[0].mxu0
    %v474 = vadd.f32 0.0, %v473
    %v475 = vpop.f32.mrb[0].mxu0
    %476 = vmatprep.mubr.bf16.mxu0 0
    %477 = vmatmul.mubr.bf16.gmra.mrb[0].mxu0 %v262
    %v478 = vpop.f32.mrb[0].mxu0
    %v479 = vadd.f32 0.0, %v478
    %v480 = vpop.f32.mrb[0].mxu0
    %v481 = vpop.f32.mrb[0].mxu0
    %v482 = vadd.f32 0.0, %v481
    %v483 = vpop.f32.mrb[0].mxu0
    %484 = vmatprep.mubr.bf16.mxu0 0
    %485 = vmatmul.mubr.bf16.gmra.mrb[0].mxu0 %v263
    %v486 = vpop.f32.mrb[0].mxu0
    %v487 = vadd.f32 0.0, %v486
    %v488 = vpop.f32.mrb[0].mxu0
    %v489 = vpop.f32.mrb[0].mxu0
    %v490 = vadd.f32 0.0, %v489
    %v491 = vpop.f32.mrb[0].mxu0
    %492 = vmatprep.mubr.bf16.mxu0 0
    %493 = vmatmul.mubr.bf16.gmra.mrb[0].mxu0 %v264
    %v494 = vpop.f32.mrb[0].mxu0
    %v495 = vadd.f32 0.0, %v494
    %v496 = vpop.f32.mrb[0].mxu0
    %v497 = vpop.f32.mrb[0].mxu0
    %v498 = vadd.f32 0.0, %v497
    %v499 = vpop.f32.mrb[0].mxu0
    %500 = vmatprep.mubr.bf16.mxu0 0
    %501 = vmatmul.mubr.bf16.gmra.mrb[0].mxu0 %v265
    %v502 = vpop.f32.mrb[0].mxu0
    %v503 = vadd.f32 0.0, %v502
    %v504 = vpop.f32.mrb[0].mxu0
    %v505 = vpop.f32.mrb[0].mxu0
    %v506 = vadd.f32 0.0, %v505
    %v507 = vpop.f32.mrb[0].mxu0
    %508 = vmatprep.mubr.bf16.mxu0 0
    %509 = vmatmul.mubr.bf16.gmra.mrb[0].mxu0 %v266
    %v510 = vpop.f32.mrb[0].mxu0
    %v511 = vadd.f32 0.0, %v510
    %v512 = vpop.f32.mrb[0].mxu0
    %v513 = vpop.f32.mrb[0].mxu0
    %v514 = vadd.f32 0.0, %v513
    %v515 = vpop.f32.mrb[0].mxu0
    %516 = vmatprep.mubr.bf16.mxu0 0
    %517 = vmatmul.mubr.bf16.gmra.mrb[0].mxu0 %v267
    %v518 = vpop.f32.mrb[0].mxu0
    %v519 = vadd.f32 0.0, %v518
    %v520 = vpop.f32.mrb[0].mxu0
    %v521 = vpop.f32.mrb[0].mxu0
    %v522 = vadd.f32 0.0, %v521
    %v523 = vpop.f32.mrb[0].mxu0
    %524 = vmatprep.mubr.bf16.mxu0 0
    %525 = vmatmul.mubr.bf16.gmra.mrb[0].mxu0 %v268
    %v526 = vpop.f32.mrb[0].mxu0
    %v527 = vadd.f32 0.0, %v526
    %v528 = vpop.f32.mrb[0].mxu0
    %v529 = vpop.f32.mrb[0].mxu0
    %v530 = vadd.f32 0.0, %v529
    %v531 = vpop.f32.mrb[0].mxu0
    %532 = vmatprep.mubr.bf16.mxu0 0
    %533 = vmatmul.mubr.bf16.gmra.mrb[0].mxu0 %v269
    %v534 = vpop.f32.mrb[0].mxu0
    %v535 = vadd.f32 0.0, %v534
    %v536 = vpop.f32.mrb[0].mxu0
    %v537 = vpop.f32.mrb[0].mxu0
    %v538 = vadd.f32 0.0, %v537
    %v539 = vpop.f32.mrb[0].mxu0
    %540 = vmatprep.mubr.bf16.mxu0 0
    %541 = vmatmul.mubr.bf16.gmra.mrb[0].mxu0 %v270
    %v542 = vpop.f32.mrb[0].mxu0
    %v543 = vadd.f32 0.0, %v542
    %v544 = vpop.f32.mrb[0].mxu0
    %v545 = vpop.f32.mrb[0].mxu0
    %v546 = vadd.f32 0.0, %v545
    %v547 = vpop.f32.mrb[0].mxu0
    %548 = vmatprep.mubr.bf16.mxu0 0
    %549 = vmatmul.mubr.bf16.gmra.mrb[0].mxu0 %v271
    %v550 = vpop.f32.mrb[0].mxu0
    %v551 = vadd.f32 0.0, %v550
    %v552 = vpop.f32.mrb[0].mxu0
    %v553 = vpop.f32.mrb[0].mxu0
    %v554 = vadd.f32 0.0, %v553
    %v555 = vpop.f32.mrb[0].mxu0
    %556 = vmatprep.mubr.bf16.mxu0 0
    %557 = vmatmul.mubr.bf16.gmra.mrb[0].mxu0 %v272
    %v558 = vpop.f32.mrb[0].mxu0
    %v559 = vadd.f32 0.0, %v558
    %v560 = vpop.f32.mrb[0].mxu0
    %v561 = vpop.f32.mrb[0].mxu0
    %v562 = vadd.f32 0.0, %v561
    %v563 = vpop.f32.mrb[0].mxu0
    %564 = vmatprep.mubr.bf16.mxu0 0
    %565 = vmatmul.mubr.bf16.gmra.mrb[0].mxu0 %v273
    %v566 = vpop.f32.mrb[0].mxu0
    %v567 = vadd.f32 0.0, %v566
    %v568 = vpop.f32.mrb[0].mxu0
    %v569 = vpop.f32.mrb[0].mxu0
    %v570 = vadd.f32 0.0, %v569
    %v571 = vpop.f32.mrb[0].mxu0
    %572 = vmatprep.mubr.bf16.mxu0 0
    %573 = vmatmul.mubr.bf16.gmra.mrb[0].mxu0 %v274
    %v574 = vpop.f32.mrb[0].mxu0
    %v575 = vadd.f32 0.0, %v574
    %v576 = vpop.f32.mrb[0].mxu0
    %v577 = vpop.f32.mrb[0].mxu0
    %v578 = vadd.f32 0.0, %v577
    %v579 = vpop.f32.mrb[0].mxu0
    %580 = vmatprep.mubr.bf16.mxu0 0
    %581 = vmatmul.mubr.bf16.gmra.mrb[0].mxu0 %v275
    %v582 = vpop.f32.mrb[0].mxu0
    %v583 = vadd.f32 0.0, %v582
    %v584 = vpop.f32.mrb[0].mxu0
    %v585 = vpop.f32.mrb[0].mxu0
    %v586 = vadd.f32 0.0, %v585
    %v587 = vpop.f32.mrb[0].mxu0
    %588 = vmatprep.mubr.bf16.mxu0 0
    %589 = vmatmul.mubr.bf16.gmra.mrb[0].mxu0 %v276
    %v590 = vpop.f32.mrb[0].mxu0
    %v591 = vadd.f32 0.0, %v590
    %v592 = vpop.f32.mrb[0].mxu0
    %v593 = vpop.f32.mrb[0].mxu0
    %v594 = vadd.f32 0.0, %v593
    %v595 = vpop.f32.mrb[0].mxu0
    %596 = vmatprep.mubr.bf16.mxu0 0
    %597 = vmatmul.mubr.bf16.gmra.mrb[0].mxu0 %v277
    %v598 = vpop.f32.mrb[0].mxu0
    %v599 = vadd.f32 0.0, %v598
    %v600 = vpop.f32.mrb[0].mxu0
    %v601 = vpop.f32.mrb[0].mxu0
    %v602 = vadd.f32 0.0, %v601
    %v603 = vpop.f32.mrb[0].mxu0
    %604 = vmatprep.mubr.bf16.mxu0 0
    %605 = vmatmul.mubr.bf16.gmra.mrb[0].mxu0 %v278
    %v606 = vpop.f32.mrb[0].mxu0
    %v607 = vadd.f32 0.0, %v606
    %v608 = vpop.f32.mrb[0].mxu0
    %v609 = vpop.f32.mrb[0].mxu0
    %v610 = vadd.f32 0.0, %v609
    %v611 = vpop.f32.mrb[0].mxu0
    %612 = vmatprep.mubr.bf16.mxu0 0
    %613 = vmatmul.mubr.bf16.gmra.mrb[0].mxu0 %v279
    %v614 = vpop.f32.mrb[0].mxu0
    %v615 = vadd.f32 0.0, %v614
    %v616 = vpop.f32.mrb[0].mxu0
    %v617 = vpop.f32.mrb[0].mxu0
    %v618 = vadd.f32 0.0, %v617
    %v619 = vpop.f32.mrb[0].mxu0
    %620 = vmatprep.mubr.bf16.mxu0 0
    %621 = vmatmul.mubr.bf16.gmra.mrb[0].mxu0 %v280
    %v622 = vpop.f32.mrb[0].mxu0
    %v623 = vadd.f32 0.0, %v622
    %v624 = vpop.f32.mrb[0].mxu0
    %v625 = vpop.f32.mrb[0].mxu0
    %v626 = vadd.f32 0.0, %v625
    %v627 = vpop.f32.mrb[0].mxu0
    %628 = vmatprep.mubr.bf16.mxu0 0
    %629 = vmatmul.mubr.bf16.gmra.mrb[0].mxu0 %v281
    %v630 = vpop.f32.mrb[0].mxu0
    %v631 = vadd.f32 0.0, %v630
    %v632 = vpop.f32.mrb[0].mxu0
    %v633 = vpop.f32.mrb[0].mxu0
    %v634 = vadd.f32 0.0, %v633
    %v635 = vpop.f32.mrb[0].mxu0
    %636 = vmatprep.mubr.bf16.mxu0 0
    %637 = vmatmul.mubr.bf16.gmra.mrb[0].mxu0 %v282
    %v638 = vpop.f32.mrb[0].mxu0
    %v639 = vadd.f32 0.0, %v638
    %v640 = vpop.f32.mrb[0].mxu0
    %v641 = vpop.f32.mrb[0].mxu0
    %v642 = vadd.f32 0.0, %v641
    %v643 = vpop.f32.mrb[0].mxu0
    %644 = vmatprep.mubr.bf16.mxu0 0
    %645 = vmatmul.mubr.bf16.gmra.mrb[0].mxu0 %v283
    %v646 = vpop.f32.mrb[0].mxu0
    %v647 = vadd.f32 0.0, %v646
    %v648 = vpop.f32.mrb[0].mxu0
    %v649 = vpop.f32.mrb[0].mxu0
    %v650 = vadd.f32 0.0, %v649
    %v651 = vpop.f32.mrb[0].mxu0
    %652 = vdwg.mxu0
    %653 = vst [vmem:[#allocation2] sm:$0xff] %v399
    %654 = vst [vmem:[#allocation2 + $0x8] sm:$0xff] %v402
    %655 = vst [vmem:[#allocation2 + $0x10] sm:$0xff] %v407
    %656 = vst [vmem:[#allocation2 + $0x18] sm:$0xff] %v410
    %657 = vst [vmem:[#allocation2 + $0x20] sm:$0xff] %v415
    %658 = vst [vmem:[#allocation2 + $0x28] sm:$0xff] %v418
    %659 = vst [vmem:[#allocation2 + $0x30] sm:$0xff] %v423
    %660 = vst [vmem:[#allocation2 + $0x38] sm:$0xff] %v426
    %661 = vst [vmem:[#allocation2 + $0x40] sm:$0xff] %v431
    %662 = vst [vmem:[#allocation2 + $0x48] sm:$0xff] %v434
    %663 = vst [vmem:[#allocation2 + $0x50] sm:$0xff] %v439
    %664 = vst [vmem:[#allocation2 + $0x58] sm:$0xff] %v442
    %665 = vst [vmem:[#allocation2 + $0x60] sm:$0xff] %v447
    %666 = vst [vmem:[#allocation2 + $0x68] sm:$0xff] %v450
    %667 = vst [vmem:[#allocation2 + $0x70] sm:$0xff] %v455
    %668 = vst [vmem:[#allocation2 + $0x78] sm:$0xff] %v458
    %669 = vst [vmem:[#allocation2 + $0x80] sm:$0xff] %v463
    %670 = vst [vmem:[#allocation2 + $0x88] sm:$0xff] %v466
    %671 = vst [vmem:[#allocation2 + $0x90] sm:$0xff] %v471
    %672 = vst [vmem:[#allocation2 + $0x98] sm:$0xff] %v474
    %673 = vst [vmem:[#allocation2 + $0xa0] sm:$0xff] %v479
    %674 = vst [vmem:[#allocation2 + $0xa8] sm:$0xff] %v482
    %675 = vst [vmem:[#allocation2 + $0xb0] sm:$0xff] %v487
    %676 = vst [vmem:[#allocation2 + $0xb8] sm:$0xff] %v490
    %677 = vst [vmem:[#allocation2 + $0xc0] sm:$0xff] %v495
    %678 = vst [vmem:[#allocation2 + $0xc8] sm:$0xff] %v498
    %679 = vst [vmem:[#allocation2 + $0xd0] sm:$0xff] %v503
    %680 = vst [vmem:[#allocation2 + $0xd8] sm:$0xff] %v506
    %681 = vst [vmem:[#allocation2 + $0xe0] sm:$0xff] %v511
    %682 = vst [vmem:[#allocation2 + $0xe8] sm:$0xff] %v514
    %683 = vst [vmem:[#allocation2 + $0xf0] sm:$0xff] %v519
    %684 = vst [vmem:[#allocation2 + $0xf8] sm:$0xff] %v522
    %685 = vst [vmem:[#allocation2 + $0x100] sm:$0xff] %v527
    %686 = vst [vmem:[#allocation2 + $0x108] sm:$0xff] %v530
    %687 = vst [vmem:[#allocation2 + $0x110] sm:$0xff] %v535
    %688 = vst [vmem:[#allocation2 + $0x118] sm:$0xff] %v538
    %689 = vst [vmem:[#allocation2 + $0x120] sm:$0xff] %v543
    %690 = vst [vmem:[#allocation2 + $0x128] sm:$0xff] %v546
    %691 = vst [vmem:[#allocation2 + $0x130] sm:$0xff] %v551
    %692 = vst [vmem:[#allocation2 + $0x138] sm:$0xff] %v554
    %693 = vst [vmem:[#allocation2 + $0x140] sm:$0xff] %v559
    %694 = vst [vmem:[#allocation2 + $0x148] sm:$0xff] %v562
    %695 = vst [vmem:[#allocation2 + $0x150] sm:$0xff] %v567
    %696 = vst [vmem:[#allocation2 + $0x158] sm:$0xff] %v570
    %697 = vst [vmem:[#allocation2 + $0x160] sm:$0xff] %v575
    %698 = vst [vmem:[#allocation2 + $0x168] sm:$0xff] %v578
    %699 = vst [vmem:[#allocation2 + $0x170] sm:$0xff] %v583
    %700 = vst [vmem:[#allocation2 + $0x178] sm:$0xff] %v586
    %701 = vst [vmem:[#allocation2 + $0x180] sm:$0xff] %v591
    %702 = vst [vmem:[#allocation2 + $0x188] sm:$0xff] %v594
    %703 = vst [vmem:[#allocation2 + $0x190] sm:$0xff] %v599
    %704 = vst [vmem:[#allocation2 + $0x198] sm:$0xff] %v602
    %705 = vst [vmem:[#allocation2 + $0x1a0] sm:$0xff] %v607
    %706 = vst [vmem:[#allocation2 + $0x1a8] sm:$0xff] %v610
    %707 = vst [vmem:[#allocation2 + $0x1b0] sm:$0xff] %v615
    %708 = vst [vmem:[#allocation2 + $0x1b8] sm:$0xff] %v618
    %709 = vst [vmem:[#allocation2 + $0x1c0] sm:$0xff] %v623
    %710 = vst [vmem:[#allocation2 + $0x1c8] sm:$0xff] %v626
    %711 = vst [vmem:[#allocation2 + $0x1d0] sm:$0xff] %v631
    %712 = vst [vmem:[#allocation2 + $0x1d8] sm:$0xff] %v634
    %713 = vst [vmem:[#allocation2 + $0x1e0] sm:$0xff] %v639
    %714 = vst [vmem:[#allocation2 + $0x1e8] sm:$0xff] %v642
    %715 = vst [vmem:[#allocation2 + $0x1f0] sm:$0xff] %v647
    %716 = vst [vmem:[#allocation2 + $0x1f8] sm:$0xff] %v650
    %v717 = vld [vmem:[#allocation2] sm:$0xff]
    %v718 = vld [vmem:[#allocation2 + $0x8] sm:$0xff]
    %v719 = vld [vmem:[#allocation2 + $0x10] sm:$0xff]
    %v720 = vld [vmem:[#allocation2 + $0x18] sm:$0xff]
    %v721 = vld [vmem:[#allocation2 + $0x20] sm:$0xff]
    %v722 = vld [vmem:[#allocation2 + $0x28] sm:$0xff]
    %v723 = vld [vmem:[#allocation2 + $0x30] sm:$0xff]
    %v724 = vld [vmem:[#allocation2 + $0x38] sm:$0xff]
    %v725 = vld [vmem:[#allocation2 + $0x40] sm:$0xff]
    %v726 = vld [vmem:[#allocation2 + $0x48] sm:$0xff]
    %v727 = vld [vmem:[#allocation2 + $0x50] sm:$0xff]
    %v728 = vld [vmem:[#allocation2 + $0x58] sm:$0xff]
    %v729 = vld [vmem:[#allocation2 + $0x60] sm:$0xff]
    %v730 = vld [vmem:[#allocation2 + $0x68] sm:$0xff]
    %v731 = vld [vmem:[#allocation2 + $0x70] sm:$0xff]
    %v732 = vld [vmem:[#allocation2 + $0x78] sm:$0xff]
    %v733 = vld [vmem:[#allocation2 + $0x80] sm:$0xff]
    %v734 = vld [vmem:[#allocation2 + $0x88] sm:$0xff]
    %v735 = vld [vmem:[#allocation2 + $0x90] sm:$0xff]
    %v736 = vld [vmem:[#allocation2 + $0x98] sm:$0xff]
    %v737 = vld [vmem:[#allocation2 + $0xa0] sm:$0xff]
    %v738 = vld [vmem:[#allocation2 + $0xa8] sm:$0xff]
    %v739 = vld [vmem:[#allocation2 + $0xb0] sm:$0xff]
    %v740 = vld [vmem:[#allocation2 + $0xb8] sm:$0xff]
    %v741 = vld [vmem:[#allocation2 + $0xc0] sm:$0xff]
    %v742 = vld [vmem:[#allocation2 + $0xc8] sm:$0xff]
    %v743 = vld [vmem:[#allocation2 + $0xd0] sm:$0xff]
    %v744 = vld [vmem:[#allocation2 + $0xd8] sm:$0xff]
    %v745 = vld [vmem:[#allocation2 + $0xe0] sm:$0xff]
    %v746 = vld [vmem:[#allocation2 + $0xe8] sm:$0xff]
    %v747 = vld [vmem:[#allocation2 + $0xf0] sm:$0xff]
    %v748 = vld [vmem:[#allocation2 + $0xf8] sm:$0xff]
    %v749 = vld [vmem:[#allocation2 + $0x100] sm:$0xff]
    %v750 = vld [vmem:[#allocation2 + $0x108] sm:$0xff]
    %v751 = vld [vmem:[#allocation2 + $0x110] sm:$0xff]
    %v752 = vld [vmem:[#allocation2 + $0x118] sm:$0xff]
    %v753 = vld [vmem:[#allocation2 + $0x120] sm:$0xff]
    %v754 = vld [vmem:[#allocation2 + $0x128] sm:$0xff]
    %v755 = vld [vmem:[#allocation2 + $0x130] sm:$0xff]
    %v756 = vld [vmem:[#allocation2 + $0x138] sm:$0xff]
    %v757 = vld [vmem:[#allocation2 + $0x140] sm:$0xff]
    %v758 = vld [vmem:[#allocation2 + $0x148] sm:$0xff]
    %v759 = vld [vmem:[#allocation2 + $0x150] sm:$0xff]
    %v760 = vld [vmem:[#allocation2 + $0x158] sm:$0xff]
    %v761 = vld [vmem:[#allocation2 + $0x160] sm:$0xff]
    %v762 = vld [vmem:[#allocation2 + $0x168] sm:$0xff]
    %v763 = vld [vmem:[#allocation2 + $0x170] sm:$0xff]
    %v764 = vld [vmem:[#allocation2 + $0x178] sm:$0xff]
    %v765 = vld [vmem:[#allocation2 + $0x180] sm:$0xff]
    %v766 = vld [vmem:[#allocation2 + $0x188] sm:$0xff]
    %v767 = vld [vmem:[#allocation2 + $0x190] sm:$0xff]
    %v768 = vld [vmem:[#allocation2 + $0x198] sm:$0xff]
    %v769 = vld [vmem:[#allocation2 + $0x1a0] sm:$0xff]
    %v770 = vld [vmem:[#allocation2 + $0x1a8] sm:$0xff]
    %v771 = vld [vmem:[#allocation2 + $0x1b0] sm:$0xff]
    %v772 = vld [vmem:[#allocation2 + $0x1b8] sm:$0xff]
    %v773 = vld [vmem:[#allocation2 + $0x1c0] sm:$0xff]
    %v774 = vld [vmem:[#allocation2 + $0x1c8] sm:$0xff]
    %v775 = vld [vmem:[#allocation2 + $0x1d0] sm:$0xff]
    %v776 = vld [vmem:[#allocation2 + $0x1d8] sm:$0xff]
    %v777 = vld [vmem:[#allocation2 + $0x1e0] sm:$0xff]
    %v778 = vld [vmem:[#allocation2 + $0x1e8] sm:$0xff]
    %v779 = vld [vmem:[#allocation2 + $0x1f0] sm:$0xff]
    %v780 = vld [vmem:[#allocation2 + $0x1f8] sm:$0xff]
    %v781 = vadd.f32 %v717, %v718
    %v782 = vadd.f32 %v781, %v719
    %v783 = vadd.f32 %v782, %v720
    %v784 = vadd.f32 %v783, %v721
    %v785 = vadd.f32 %v784, %v722
    %v786 = vadd.f32 %v785, %v723
    %v787 = vadd.f32 %v786, %v724
    %v788 = vadd.f32 %v787, %v725
    %v789 = vadd.f32 %v788, %v726
    %v790 = vadd.f32 %v789, %v727
    %v791 = vadd.f32 %v790, %v728
    %v792 = vadd.f32 %v791, %v729
    %v793 = vadd.f32 %v792, %v730
    %v794 = vadd.f32 %v793, %v731
    %v795 = vadd.f32 %v794, %v732
    %v796 = vadd.f32 %v795, %v733
    %v797 = vadd.f32 %v796, %v734
    %v798 = vadd.f32 %v797, %v735
    %v799 = vadd.f32 %v798, %v736
    %v800 = vadd.f32 %v799, %v737
    %v801 = vadd.f32 %v800, %v738
    %v802 = vadd.f32 %v801, %v739
    %v803 = vadd.f32 %v802, %v740
    %v804 = vadd.f32 %v803, %v741
    %v805 = vadd.f32 %v804, %v742
    %v806 = vadd.f32 %v805, %v743
    %v807 = vadd.f32 %v806, %v744
    %v808 = vadd.f32 %v807, %v745
    %v809 = vadd.f32 %v808, %v746
    %v810 = vadd.f32 %v809, %v747
    %v811 = vadd.f32 %v810, %v748
    %v812 = vadd.f32 %v811, %v749
    %v813 = vadd.f32 %v812, %v750
    %v814 = vadd.f32 %v813, %v751
    %v815 = vadd.f32 %v814, %v752
    %v816 = vadd.f32 %v815, %v753
    %v817 = vadd.f32 %v816, %v754
    %v818 = vadd.f32 %v817, %v755
    %v819 = vadd.f32 %v818, %v756
    %v820 = vadd.f32 %v819, %v757
    %v821 = vadd.f32 %v820, %v758
    %v822 = vadd.f32 %v821, %v759
    %v823 = vadd.f32 %v822, %v760
    %v824 = vadd.f32 %v823, %v761
    %v825 = vadd.f32 %v824, %v762
    %v826 = vadd.f32 %v825, %v763
    %v827 = vadd.f32 %v826, %v764
    %v828 = vadd.f32 %v827, %v765
    %v829 = vadd.f32 %v828, %v766
    %v830 = vadd.f32 %v829, %v767
    %v831 = vadd.f32 %v830, %v768
    %v832 = vadd.f32 %v831, %v769
    %v833 = vadd.f32 %v832, %v770
    %v834 = vadd.f32 %v833, %v771
    %v835 = vadd.f32 %v834, %v772
    %v836 = vadd.f32 %v835, %v773
    %v837 = vadd.f32 %v836, %v774
    %v838 = vadd.f32 %v837, %v775
    %v839 = vadd.f32 %v838, %v776
    %v840 = vadd.f32 %v839, %v777
    %v841 = vadd.f32 %v840, %v778
    %v842 = vadd.f32 %v841, %v779
    %v843 = vadd.f32 %v842, %v780
    %v844 = vrot.slane %v843, 4
    %v845 = vadd.f32 %v843, %v844
    %v846 = vrot.slane %v845, 2
    %v847 = vadd.f32 %v845, %v846
    %v848 = vrot.slane %v847, 1
    %v849 = vadd.f32 %v847, %v848
    %v850 = vmul.f32 %v717, %v717
    %v851 = vmul.f32 %v718, %v718
    %v852 = vmul.f32 %v719, %v719
    %v853 = vmul.f32 %v720, %v720
    %v854 = vmul.f32 %v721, %v721
    %v855 = vmul.f32 %v722, %v722
    %v856 = vmul.f32 %v723, %v723
    %v857 = vmul.f32 %v724, %v724
    %v858 = vmul.f32 %v725, %v725
    %v859 = vmul.f32 %v726, %v726
    %v860 = vmul.f32 %v727, %v727
    %v861 = vmul.f32 %v728, %v728
    %v862 = vmul.f32 %v729, %v729
    %v863 = vmul.f32 %v730, %v730
    %v864 = vmul.f32 %v731, %v731
    %v865 = vmul.f32 %v732, %v732
    %v866 = vmul.f32 %v733, %v733
    %v867 = vmul.f32 %v734, %v734
    %v868 = vmul.f32 %v735, %v735
    %v869 = vmul.f32 %v736, %v736
    %v870 = vmul.f32 %v737, %v737
    %v871 = vmul.f32 %v738, %v738
    %v872 = vmul.f32 %v739, %v739
    %v873 = vmul.f32 %v740, %v740
    %v874 = vmul.f32 %v741, %v741
    %v875 = vmul.f32 %v742, %v742
    %v876 = vmul.f32 %v743, %v743
    %v877 = vmul.f32 %v744, %v744
    %v878 = vmul.f32 %v745, %v745
    %v879 = vmul.f32 %v746, %v746
    %v880 = vmul.f32 %v747, %v747
    %v881 = vmul.f32 %v748, %v748
    %v882 = vmul.f32 %v749, %v749
    %v883 = vmul.f32 %v750, %v750
    %v884 = vmul.f32 %v751, %v751
    %v885 = vmul.f32 %v752, %v752
    %v886 = vmul.f32 %v753, %v753
    %v887 = vmul.f32 %v754, %v754
    %v888 = vmul.f32 %v755, %v755
    %v889 = vmul.f32 %v756, %v756
    %v890 = vmul.f32 %v757, %v757
    %v891 = vmul.f32 %v758, %v758
    %v892 = vmul.f32 %v759, %v759
    %v893 = vmul.f32 %v760, %v760
    %v894 = vmul.f32 %v761, %v761
    %v895 = vmul.f32 %v762, %v762
    %v896 = vmul.f32 %v763, %v763
    %v897 = vmul.f32 %v764, %v764
    %v898 = vmul.f32 %v765, %v765
    %v899 = vmul.f32 %v766, %v766
    %v900 = vmul.f32 %v767, %v767
    %v901 = vmul.f32 %v768, %v768
    %v902 = vmul.f32 %v769, %v769
    %v903 = vmul.f32 %v770, %v770
    %v904 = vmul.f32 %v771, %v771
    %v905 = vmul.f32 %v772, %v772
    %v906 = vmul.f32 %v773, %v773
    %v907 = vmul.f32 %v774, %v774
    %v908 = vmul.f32 %v775, %v775
    %v909 = vmul.f32 %v776, %v776
    %v910 = vmul.f32 %v777, %v777
    %v911 = vmul.f32 %v778, %v778
    %v912 = vmul.f32 %v779, %v779
    %v913 = vmul.f32 %v780, %v780
    %v914 = vadd.f32 %v850, %v851
    %v915 = vadd.f32 %v914, %v852
    %v916 = vadd.f32 %v915, %v853
    %v917 = vadd.f32 %v916, %v854
    %v918 = vadd.f32 %v917, %v855
    %v919 = vadd.f32 %v918, %v856
    %v920 = vadd.f32 %v919, %v857
    %v921 = vadd.f32 %v920, %v858
    %v922 = vadd.f32 %v921, %v859
    %v923 = vadd.f32 %v922, %v860
    %v924 = vadd.f32 %v923, %v861
    %v925 = vadd.f32 %v924, %v862
    %v926 = vadd.f32 %v925, %v863
    %v927 = vadd.f32 %v926, %v864
    %v928 = vadd.f32 %v927, %v865
    %v929 = vadd.f32 %v928, %v866
    %v930 = vadd.f32 %v929, %v867
    %v931 = vadd.f32 %v930, %v868
    %v932 = vadd.f32 %v931, %v869
    %v933 = vadd.f32 %v932, %v870
    %v934 = vadd.f32 %v933, %v871
    %v935 = vadd.f32 %v934, %v872
    %v936 = vadd.f32 %v935, %v873
    %v937 = vadd.f32 %v936, %v874
    %v938 = vadd.f32 %v937, %v875
    %v939 = vadd.f32 %v938, %v876
    %v940 = vadd.f32 %v939, %v877
    %v941 = vadd.f32 %v940, %v878
    %v942 = vadd.f32 %v941, %v879
    %v943 = vadd.f32 %v942, %v880
    %v944 = vadd.f32 %v943, %v881
    %v945 = vadd.f32 %v944, %v882
    %v946 = vadd.f32 %v945, %v883
    %v947 = vadd.f32 %v946, %v884
    %v948 = vadd.f32 %v947, %v885
    %v949 = vadd.f32 %v948, %v886
    %v950 = vadd.f32 %v949, %v887
    %v951 = vadd.f32 %v950, %v888
    %v952 = vadd.f32 %v951, %v889
    %v953 = vadd.f32 %v952, %v890
    %v954 = vadd.f32 %v953, %v891
    %v955 = vadd.f32 %v954, %v892
    %v956 = vadd.f32 %v955, %v893
    %v957 = vadd.f32 %v956, %v894
    %v958 = vadd.f32 %v957, %v895
    %v959 = vadd.f32 %v958, %v896
    %v960 = vadd.f32 %v959, %v897
    %v961 = vadd.f32 %v960, %v898
    %v962 = vadd.f32 %v961, %v899
    %v963 = vadd.f32 %v962, %v900
    %v964 = vadd.f32 %v963, %v901
    %v965 = vadd.f32 %v964, %v902
    %v966 = vadd.f32 %v965, %v903
    %v967 = vadd.f32 %v966, %v904
    %v968 = vadd.f32 %v967, %v905
    %v969 = vadd.f32 %v968, %v906
    %v970 = vadd.f32 %v969, %v907
    %v971 = vadd.f32 %v970, %v908
    %v972 = vadd.f32 %v971, %v909
    %v973 = vadd.f32 %v972, %v910
    %v974 = vadd.f32 %v973, %v911
    %v975 = vadd.f32 %v974, %v912
    %v976 = vadd.f32 %v975, %v913
    %v977 = vrot.slane %v976, 4
    %v978 = vadd.f32 %v976, %v977
    %v979 = vrot.slane %v978, 2
    %v980 = vadd.f32 %v978, %v979
    %v981 = vrot.slane %v980, 1
    %v982 = vadd.f32 %v980, %v981
    %v983 = vmul.f32 %v849, 0.001953125
    %v984 = vmul.f32 %v982, 0.001953125
    %v985 = vmul.f32 %v983, %v983
    %v986 = vsub.f32 %v984, %v985
    %v987 = vmax.f32 %v986, 0.0
    %v988 = vld [vmem:[%s2] sm:$0x1]
    %v989 = vld [vmem:[%s2 + $0x1] sm:$0x1]
    %v990 = vadd.f32 %v987, 1e-05
    %v991 = vrsqrt.pop %v990
    %v992 = vmul.f32 %v988, %v991
    %v993 = vmul.f32 %v983, %v992
    %v994 = vsub.f32 %v989, %v993
    %v995 = vlaneseq
    %v996 = vshrl.u32 %v995, 7
    %v997 = vsub.s32 0, %v996
    %v998 = vrot.slane %v992, %v997
    %v999 = vmul.f32 %v717, %v998
    %v1000 = vmul.f32 %v718, %v998
    %v1001 = vmul.f32 %v719, %v998
    %v1002 = vmul.f32 %v720, %v998
    %v1003 = vmul.f32 %v721, %v998
    %v1004 = vmul.f32 %v722, %v998
    %v1005 = vmul.f32 %v723, %v998
    %v1006 = vmul.f32 %v724, %v998
    %v1007 = vmul.f32 %v725, %v998
    %v1008 = vmul.f32 %v726, %v998
    %v1009 = vmul.f32 %v727, %v998
    %v1010 = vmul.f32 %v728, %v998
    %v1011 = vmul.f32 %v729, %v998
    %v1012 = vmul.f32 %v730, %v998
    %v1013 = vmul.f32 %v731, %v998
    %v1014 = vmul.f32 %v732, %v998
    %v1015 = vmul.f32 %v733, %v998
    %v1016 = vmul.f32 %v734, %v998
    %v1017 = vmul.f32 %v735, %v998
    %v1018 = vmul.f32 %v736, %v998
    %v1019 = vmul.f32 %v737, %v998
    %v1020 = vmul.f32 %v738, %v998
    %v1021 = vmul.f32 %v739, %v998
    %v1022 = vmul.f32 %v740, %v998
    %v1023 = vmul.f32 %v741, %v998
    %v1024 = vmul.f32 %v742, %v998
    %v1025 = vmul.f32 %v743, %v998
    %v1026 = vmul.f32 %v744, %v998
    %v1027 = vmul.f32 %v745, %v998
    %v1028 = vmul.f32 %v746, %v998
    %v1029 = vmul.f32 %v747, %v998
    %v1030 = vmul.f32 %v748, %v998
    %v1031 = vmul.f32 %v749, %v998
    %v1032 = vmul.f32 %v750, %v998
    %v1033 = vmul.f32 %v751, %v998
    %v1034 = vmul.f32 %v752, %v998
    %v1035 = vmul.f32 %v753, %v998
    %v1036 = vmul.f32 %v754, %v998
    %v1037 = vmul.f32 %v755, %v998
    %v1038 = vmul.f32 %v756, %v998
    %v1039 = vmul.f32 %v757, %v998
    %v1040 = vmul.f32 %v758, %v998
    %v1041 = vmul.f32 %v759, %v998
    %v1042 = vmul.f32 %v760, %v998
    %v1043 = vmul.f32 %v761, %v998
    %v1044 = vmul.f32 %v762, %v998
    %v1045 = vmul.f32 %v763, %v998
    %v1046 = vmul.f32 %v764, %v998
    %v1047 = vmul.f32 %v765, %v998
    %v1048 = vmul.f32 %v766, %v998
    %v1049 = vmul.f32 %v767, %v998
    %v1050 = vmul.f32 %v768, %v998
    %v1051 = vmul.f32 %v769, %v998
    %v1052 = vmul.f32 %v770, %v998
    %v1053 = vmul.f32 %v771, %v998
    %v1054 = vmul.f32 %v772, %v998
    %v1055 = vmul.f32 %v773, %v998
    %v1056 = vmul.f32 %v774, %v998
    %v1057 = vmul.f32 %v775, %v998
    %v1058 = vmul.f32 %v776, %v998
    %v1059 = vmul.f32 %v777, %v998
    %v1060 = vmul.f32 %v778, %v998
    %v1061 = vmul.f32 %v779, %v998
    %v1062 = vmul.f32 %v780, %v998
    %v1063 = vlaneseq
    %v1064 = vshrl.u32 %v1063, 7
    %v1065 = vsub.s32 0, %v1064
    %v1066 = vrot.slane %v994, %v1065
    %v1067 = vadd.f32 %v999, %v1066
    %v1068 = vadd.f32 %v1000, %v1066
    %v1069 = vadd.f32 %v1001, %v1066
    %v1070 = vadd.f32 %v1002, %v1066
    %v1071 = vadd.f32 %v1003, %v1066
    %v1072 = vadd.f32 %v1004, %v1066
    %v1073 = vadd.f32 %v1005, %v1066
    %v1074 = vadd.f32 %v1006, %v1066
    %v1075 = vadd.f32 %v1007, %v1066
    %v1076 = vadd.f32 %v1008, %v1066
    %v1077 = vadd.f32 %v1009, %v1066
    %v1078 = vadd.f32 %v1010, %v1066
    %v1079 = vadd.f32 %v1011, %v1066
    %v1080 = vadd.f32 %v1012, %v1066
    %v1081 = vadd.f32 %v1013, %v1066
    %v1082 = vadd.f32 %v1014, %v1066
    %v1083 = vadd.f32 %v1015, %v1066
    %v1084 = vadd.f32 %v1016, %v1066
    %v1085 = vadd.f32 %v1017, %v1066
    %v1086 = vadd.f32 %v1018, %v1066
    %v1087 = vadd.f32 %v1019, %v1066
    %v1088 = vadd.f32 %v1020, %v1066
    %v1089 = vadd.f32 %v1021, %v1066
    %v1090 = vadd.f32 %v1022, %v1066
    %v1091 = vadd.f32 %v1023, %v1066
    %v1092 = vadd.f32 %v1024, %v1066
    %v1093 = vadd.f32 %v1025, %v1066
    %v1094 = vadd.f32 %v1026, %v1066
    %v1095 = vadd.f32 %v1027, %v1066
    %v1096 = vadd.f32 %v1028, %v1066
    %v1097 = vadd.f32 %v1029, %v1066
    %v1098 = vadd.f32 %v1030, %v1066
    %v1099 = vadd.f32 %v1031, %v1066
    %v1100 = vadd.f32 %v1032, %v1066
    %v1101 = vadd.f32 %v1033, %v1066
    %v1102 = vadd.f32 %v1034, %v1066
    %v1103 = vadd.f32 %v1035, %v1066
    %v1104 = vadd.f32 %v1036, %v1066
    %v1105 = vadd.f32 %v1037, %v1066
    %v1106 = vadd.f32 %v1038, %v1066
    %v1107 = vadd.f32 %v1039, %v1066
    %v1108 = vadd.f32 %v1040, %v1066
    %v1109 = vadd.f32 %v1041, %v1066
    %v1110 = vadd.f32 %v1042, %v1066
    %v1111 = vadd.f32 %v1043, %v1066
    %v1112 = vadd.f32 %v1044, %v1066
    %v1113 = vadd.f32 %v1045, %v1066
    %v1114 = vadd.f32 %v1046, %v1066
    %v1115 = vadd.f32 %v1047, %v1066
    %v1116 = vadd.f32 %v1048, %v1066
    %v1117 = vadd.f32 %v1049, %v1066
    %v1118 = vadd.f32 %v1050, %v1066
    %v1119 = vadd.f32 %v1051, %v1066
    %v1120 = vadd.f32 %v1052, %v1066
    %v1121 = vadd.f32 %v1053, %v1066
    %v1122 = vadd.f32 %v1054, %v1066
    %v1123 = vadd.f32 %v1055, %v1066
    %v1124 = vadd.f32 %v1056, %v1066
    %v1125 = vadd.f32 %v1057, %v1066
    %v1126 = vadd.f32 %v1058, %v1066
    %v1127 = vadd.f32 %v1059, %v1066
    %v1128 = vadd.f32 %v1060, %v1066
    %v1129 = vadd.f32 %v1061, %v1066
    %v1130 = vadd.f32 %v1062, %v1066
    %v1131 = vmax.f32 %v1067, 0.0
    %v1132 = vmax.f32 %v1068, 0.0
    %v1133 = vmax.f32 %v1069, 0.0
    %v1134 = vmax.f32 %v1070, 0.0
    %v1135 = vmax.f32 %v1071, 0.0
    %v1136 = vmax.f32 %v1072, 0.0
    %v1137 = vmax.f32 %v1073, 0.0
    %v1138 = vmax.f32 %v1074, 0.0
    %v1139 = vmax.f32 %v1075, 0.0
    %v1140 = vmax.f32 %v1076, 0.0
    %v1141 = vmax.f32 %v1077, 0.0
    %v1142 = vmax.f32 %v1078, 0.0
    %v1143 = vmax.f32 %v1079, 0.0
    %v1144 = vmax.f32 %v1080, 0.0
    %v1145 = vmax.f32 %v1081, 0.0
    %v1146 = vmax.f32 %v1082, 0.0
    %v1147 = vmax.f32 %v1083, 0.0
    %v1148 = vmax.f32 %v1084, 0.0
    %v1149 = vmax.f32 %v1085, 0.0
    %v1150 = vmax.f32 %v1086, 0.0
    %v1151 = vmax.f32 %v1087, 0.0
    %v1152 = vmax.f32 %v1088, 0.0
    %v1153 = vmax.f32 %v1089, 0.0
    %v1154 = vmax.f32 %v1090, 0.0
    %v1155 = vmax.f32 %v1091, 0.0
    %v1156 = vmax.f32 %v1092, 0.0
    %v1157 = vmax.f32 %v1093, 0.0
    %v1158 = vmax.f32 %v1094, 0.0
    %v1159 = vmax.f32 %v1095, 0.0
    %v1160 = vmax.f32 %v1096, 0.0
    %v1161 = vmax.f32 %v1097, 0.0
    %v1162 = vmax.f32 %v1098, 0.0
    %v1163 = vmax.f32 %v1099, 0.0
    %v1164 = vmax.f32 %v1100, 0.0
    %v1165 = vmax.f32 %v1101, 0.0
    %v1166 = vmax.f32 %v1102, 0.0
    %v1167 = vmax.f32 %v1103, 0.0
    %v1168 = vmax.f32 %v1104, 0.0
    %v1169 = vmax.f32 %v1105, 0.0
    %v1170 = vmax.f32 %v1106, 0.0
    %v1171 = vmax.f32 %v1107, 0.0
    %v1172 = vmax.f32 %v1108, 0.0
    %v1173 = vmax.f32 %v1109, 0.0
    %v1174 = vmax.f32 %v1110, 0.0
    %v1175 = vmax.f32 %v1111, 0.0
    %v1176 = vmax.f32 %v1112, 0.0
    %v1177 = vmax.f32 %v1113, 0.0
    %v1178 = vmax.f32 %v1114, 0.0
    %v1179 = vmax.f32 %v1115, 0.0
    %v1180 = vmax.f32 %v1116, 0.0
    %v1181 = vmax.f32 %v1117, 0.0
    %v1182 = vmax.f32 %v1118, 0.0
    %v1183 = vmax.f32 %v1119, 0.0
    %v1184 = vmax.f32 %v1120, 0.0
    %v1185 = vmax.f32 %v1121, 0.0
    %v1186 = vmax.f32 %v1122, 0.0
    %v1187 = vmax.f32 %v1123, 0.0
    %v1188 = vmax.f32 %v1124, 0.0
    %v1189 = vmax.f32 %v1125, 0.0
    %v1190 = vmax.f32 %v1126, 0.0
    %v1191 = vmax.f32 %v1127, 0.0
    %v1192 = vmax.f32 %v1128, 0.0
    %v1193 = vmax.f32 %v1129, 0.0
    %v1194 = vmax.f32 %v1130, 0.0
    %v1195 = vadd.f32 %v1131, %v1132
    %v1196 = vadd.f32 %v1195, %v1133
    %v1197 = vadd.f32 %v1196, %v1134
    %v1198 = vadd.f32 %v1197, %v1135
    %v1199 = vadd.f32 %v1198, %v1136
    %v1200 = vadd.f32 %v1199, %v1137
    %v1201 = vadd.f32 %v1200, %v1138
    %v1202 = vadd.f32 %v1201, %v1139
    %v1203 = vadd.f32 %v1202, %v1140
    %v1204 = vadd.f32 %v1203, %v1141
    %v1205 = vadd.f32 %v1204, %v1142
    %v1206 = vadd.f32 %v1205, %v1143
    %v1207 = vadd.f32 %v1206, %v1144
    %v1208 = vadd.f32 %v1207, %v1145
    %v1209 = vadd.f32 %v1208, %v1146
    %v1210 = vadd.f32 %v1209, %v1147
    %v1211 = vadd.f32 %v1210, %v1148
    %v1212 = vadd.f32 %v1211, %v1149
    %v1213 = vadd.f32 %v1212, %v1150
    %v1214 = vadd.f32 %v1213, %v1151
    %v1215 = vadd.f32 %v1214, %v1152
    %v1216 = vadd.f32 %v1215, %v1153
    %v1217 = vadd.f32 %v1216, %v1154
    %v1218 = vadd.f32 %v1217, %v1155
    %v1219 = vadd.f32 %v1218, %v1156
    %v1220 = vadd.f32 %v1219, %v1157
    %v1221 = vadd.f32 %v1220, %v1158
    %v1222 = vadd.f32 %v1221, %v1159
    %v1223 = vadd.f32 %v1222, %v1160
    %v1224 = vadd.f32 %v1223, %v1161
    %v1225 = vadd.f32 %v1224, %v1162
    %v1226 = vrot.slane %v1225, 4
    %v1227 = vadd.f32 %v1225, %v1226
    %v1228 = vrot.slane %v1227, 2
    %v1229 = vadd.f32 %v1227, %v1228
    %v1230 = vrot.slane %v1229, 1
    %v1231 = vadd.f32 %v1229, %v1230
    %v1232 = vadd.f32 %v1163, %v1164
    %v1233 = vadd.f32 %v1232, %v1165
    %v1234 = vadd.f32 %v1233, %v1166
    %v1235 = vadd.f32 %v1234, %v1167
    %v1236 = vadd.f32 %v1235, %v1168
    %v1237 = vadd.f32 %v1236, %v1169
    %v1238 = vadd.f32 %v1237, %v1170
    %v1239 = vadd.f32 %v1238, %v1171
    %v1240 = vadd.f32 %v1239, %v1172
    %v1241 = vadd.f32 %v1240, %v1173
    %v1242 = vadd.f32 %v1241, %v1174
    %v1243 = vadd.f32 %v1242, %v1175
    %v1244 = vadd.f32 %v1243, %v1176
    %v1245 = vadd.f32 %v1244, %v1177
    %v1246 = vadd.f32 %v1245, %v1178
    %v1247 = vadd.f32 %v1246, %v1179
    %v1248 = vadd.f32 %v1247, %v1180
    %v1249 = vadd.f32 %v1248, %v1181
    %v1250 = vadd.f32 %v1249, %v1182
    %v1251 = vadd.f32 %v1250, %v1183
    %v1252 = vadd.f32 %v1251, %v1184
    %v1253 = vadd.f32 %v1252, %v1185
    %v1254 = vadd.f32 %v1253, %v1186
    %v1255 = vadd.f32 %v1254, %v1187
    %v1256 = vadd.f32 %v1255, %v1188
    %v1257 = vadd.f32 %v1256, %v1189
    %v1258 = vadd.f32 %v1257, %v1190
    %v1259 = vadd.f32 %v1258, %v1191
    %v1260 = vadd.f32 %v1259, %v1192
    %v1261 = vadd.f32 %v1260, %v1193
    %v1262 = vadd.f32 %v1261, %v1194
    %v1263 = vrot.slane %v1262, 4
    %v1264 = vadd.f32 %v1262, %v1263
    %v1265 = vrot.slane %v1264, 2
    %v1266 = vadd.f32 %v1264, %v1265
    %v1267 = vrot.slane %v1266, 1
    %v1268 = vadd.f32 %v1266, %v1267
    %v1269 = vmul.f32 %v1231, 0.00390625
    %v1270 = vmul.f32 %v1268, 0.00390625
    %vm1273 = vcmask 1041409
    %v1274 = vsel %vm1273, %v1270, %v1269
    %1276 = vst [vmem:[#allocation8] sm:$0x3] %v1274
    // Predicated region
    $region22: #{tpu_custom_call.1} parent=1 // pred_check
      _
    $region23: #{tpu_custom_call.1} parent=1 // pred_check_branch
      %1278 = sbr.rel (0) target = $region25
    $region24: #{tpu_custom_call.1} parent=1 // pred_region
      %s1280 = ssub.s32 32, 32
      %1281 = vsyncadd [#allocation5], %s1280
      %s1283 = sshll.u32 [#allocation8], 4
      %s1284 = int_to_ptr.vmem [resolvable:$true] %s1283
      %1286 = dma.vmem_to_hbm [thread:$0]  %s1284, 32, %s3, [#allocation5]
    $region25: #{tpu_custom_call.1} parent=1 // pred_fallthru
      _
    // Predicated region
    $region26: #{tpu_custom_call.1} parent=1 // pred_check
      _
    $region27: #{tpu_custom_call.1} parent=1 // pred_check_branch
      %1288 = sbr.rel (0) target = $region29
    $region28: #{tpu_custom_call.1} parent=1 // pred_region
      %1289 = dma.done [#allocation5], 32
    $region29: #{tpu_custom_call.1} parent=1 // pred_fallthru
      _
    %1290 = vsyncpa [#allocation4], 1
    %1291 = vsyncpa [#allocation7], 1
    %1292 = vsyncpa [#allocation5], 1

</llo_original>
